<compile_context>
chip_gen: v5e
topology: v5e:2x2
jax: 0.10.0
libtpu: 0.0.40
codegen_flags: <defaults>
</compile_context>

<pallas_src>
import math

import jax
import jax.numpy as jnp
from jax.experimental import pallas as pl
from jax.experimental.pallas import tpu as pltpu


def make_pos_embedding(emb_size: int, max_length: int = 1000,
                       dtype=jnp.float32) -> jnp.ndarray:
    """Sinusoidal table, matching the PyTorch __init__ exactly.

    pos_val = exp(log(pos) - arange(0, emb_size, 2) * log(10000) / emb_size)
    (row 0: log(0) = -inf -> pos_val = 0 -> sin=0, cos=1, same as torch)
    """
    pos = jnp.arange(max_length, dtype=jnp.float32).reshape(max_length, 1)
    div = jnp.arange(0, emb_size, 2, dtype=jnp.float32) * (
        math.log(10000.0) / emb_size)
    pos_val = jnp.exp(jnp.log(pos) - div)          # [max_length, emb_size//2]
    pe = jnp.zeros((max_length, emb_size), dtype)
    pe = pe.at[:, 0::2].set(jnp.sin(pos_val).astype(dtype))
    pe = pe.at[:, 1::2].set(jnp.cos(pos_val).astype(dtype))
    return pe


# --------------------------------------------------------------------------
# Kernels
# --------------------------------------------------------------------------

def _eval_kernel(x_ref, pos_ref, o_ref):
    # x_ref / pos_ref / o_ref are all (TS, E2) VMEM blocks (batch dim squeezed).
    o_ref[...] = x_ref[...] + pos_ref[...]


def _make_train_kernel(dropout_p: float):
    keep = 1.0 - dropout_p
    inv_keep = 1.0 / keep
    # uint32 threshold: P(bits < thr) == keep  (bits uniform in [0, 2^32)).
    thr_int = min(int(keep * (1 << 32)), (1 << 32) - 1)

    def kernel(seed_ref, x_ref, pos_ref, o_ref):
        y = x_ref[...] + pos_ref[...]
        # Unique PRNG stream per (s_tile, batch) grid point of this call.
        pltpu.prng_seed(seed_ref[0]
                        + pl.program_id(0) * pl.num_programs(1)
                        + pl.program_id(1))
        bits = pltpu.prng_random_bits(y.shape).astype(jnp.uint32)
        kept = bits < jnp.uint32(thr_int)
        # Inverted dropout: keep with prob (1-p), scale kept values by 1/(1-p).
        o_ref[...] = jnp.where(kept, y * inv_keep, jnp.zeros_like(y))

    return kernel


# --------------------------------------------------------------------------
# Wrapper
# --------------------------------------------------------------------------

def _pick_fold(S: int, E: int) -> int:
    """Fold factor so the last (lane) dim becomes a multiple of 128."""
    if E % 128 == 0:
        return 1
    fold = 128 // math.gcd(E, 128)
    return fold if (S % fold == 0) else 1


def positional_encoding(token_embedding: jnp.ndarray,
                        pos_embedding: jnp.ndarray,
                        *,
                        dropout_p: float = 0.1,
                        training: bool = False,
                        seed: int = 0) -> jnp.ndarray:
    """forward(token_embedding) = dropout(token_embedding + pos_embedding[:S])."""
    B, S, E = token_embedding.shape
    dtype = token_embedding.dtype
    pe = pos_embedding[:S, :].astype(dtype)          # glue: slice [:S]

    if training and dropout_p >= 1.0:
        # torch.nn.Dropout(p=1.0) drops everything.
        return jnp.zeros_like(token_embedding)

    # ---- lane-dense layout: fold positions into the lane axis ----
    fold = _pick_fold(S, E)
    S2, E2 = S // fold, E * fold
    x2 = token_embedding.reshape(B, S2, E2)
    pe2 = pe.reshape(S2, E2)

    # ---- tile the sequence axis: ~1 MiB blocks -> double-buffered working
    # set (~6 MiB) fits the scoped VMEM defaults of v5e (16 MiB), v6e (32 MiB)
    # and v7x (32 MiB scoped / 64 MiB physical). ----
    itemsize = jnp.dtype(dtype).itemsize
    row_bytes = E2 * itemsize
    target_block_bytes = 1 << 20
    ts = max(1, target_block_bytes // row_bytes)
    if ts >= 8:
        ts -= ts % 8                                  # keep sublane-aligned
    ts = min(ts, S2)
    grid_s = pl.cdiv(S2, ts)

    # batch innermost -> pos tile re-DMA'd only when the s tile changes;
    # both axes independent -> megacore sharding on v7x.
    grid = (grid_s, B)
    compiler_params = pltpu.CompilerParams(
        dimension_semantics=("parallel", "parallel"),
        vmem_limit_bytes=32 * 1024 * 1024)

    use_dropout = training and dropout_p > 0.0
    out_shape = jax.ShapeDtypeStruct((B, S2, E2), dtype)

    if use_dropout:
        # TODO(synk): in-kernel dropout uses the TPU hardware PRNG
        # (pltpu.prng_seed / prng_random_bits); it runs on real TPUs only
        # (no CPU-interpret lowering) and is not bit-identical to torch RNG.
        kernel = _make_train_kernel(dropout_p)
        seed_arr = jnp.array([seed], dtype=jnp.int32)
        grid_spec = pltpu.PrefetchScalarGridSpec(
            num_scalar_prefetch=1,                    # seed lands in SMEM
            grid=grid,
            in_specs=[
                pl.BlockSpec((None, ts, E2), lambda s, b, sd: (b, s, 0)),
                pl.BlockSpec((ts, E2), lambda s, b, sd: (s, 0)),
            ],
            out_specs=pl.BlockSpec((None, ts, E2), lambda s, b, sd: (b, s, 0)),
        )
        out2 = pl.pallas_call(
            kernel,
            out_shape=out_shape,
            grid_spec=grid_spec,
            compiler_params=compiler_params,
        )(seed_arr, x2, pe2)
    else:
        # Eval / p==0 path: no scalar prefetch, no dead seed argument.
        grid_spec = pltpu.PrefetchScalarGridSpec(
            num_scalar_prefetch=0,
            grid=grid,
            in_specs=[
                pl.BlockSpec((None, ts, E2), lambda s, b: (b, s, 0)),
                pl.BlockSpec((ts, E2), lambda s, b: (s, 0)),
            ],
            out_specs=pl.BlockSpec((None, ts, E2), lambda s, b: (b, s, 0)),
        )
        out2 = pl.pallas_call(
            _eval_kernel,
            out_shape=out_shape,
            grid_spec=grid_spec,
            compiler_params=compiler_params,
        )(x2, pe2)

    return out2.reshape(B, S, E)


# --------------------------------------------------------------------------
# Demo / self-check
# --------------------------------------------------------------------------

if __name__ == "__main__":
    # Small shapes consistent with the module's forward: [batch, seq, emb].
    B, S, E = 2, 8, 32
    MAX_LEN = 1000
    DROPOUT = 0.1

    key = jax.random.PRNGKey(0)
    x = jax.random.normal(key, (B, S, E), dtype=jnp.float32)

    pos_embedding = make_pos_embedding(E, MAX_LEN)              # [1000, 32]

    # Eval-mode forward (nn.Dropout is identity at eval) — deterministic check.
    out = positional_encoding(x, pos_embedding,
                              dropout_p=DROPOUT, training=False)
    out = jax.block_until_ready(out)

    ref = x + pos_embedding[:S, :][None, :, :]
    assert out.shape == (B, S, E)
    assert jnp.allclose(out, ref, atol=1e-6, rtol=1e-6), "mismatch vs reference"

    print("KERNEL_OK")
</pallas_src>

<mosaic_0001>
module attributes {stable_mosaic.version = 11 : i64} {
  func.func @_eval_kernel(%arg0: i32, %arg1: i32, %arg2: memref<1x2x128xf32, #tpu.memory_space<vmem>>, %arg3: memref<2x128xf32, #tpu.memory_space<vmem>>, %arg4: memref<1x2x128xf32, #tpu.memory_space<vmem>>) attributes {dimension_semantics = [#tpu.dimension_semantics<parallel>, #tpu.dimension_semantics<parallel>], iteration_bounds = array<i64: 1, 2>, scalar_prefetch = 0 : i64, scratch_operands = 0 : i64, tpu.core_type = #tpu.core_type<tc>, window_params = [{transform_indices = @transform_0, window_bounds = array<i64: 1, 2, 128>}, {transform_indices = @transform_1, window_bounds = array<i64: 2, 128>}, {transform_indices = @transform_2, window_bounds = array<i64: 1, 2, 128>}]} {
    %c0 = arith.constant 0 : index
    %c0_0 = arith.constant 0 : index
    %c0_1 = arith.constant 0 : index
    %0 = vector.load %arg2[%c0, %c0_0, %c0_1] : memref<1x2x128xf32, #tpu.memory_space<vmem>>, vector<1x2x128xf32>
    %1 = vector.shape_cast %0 : vector<1x2x128xf32> to vector<2x128xf32>
    %c0_2 = arith.constant 0 : index
    %c0_3 = arith.constant 0 : index
    %2 = vector.load %arg3[%c0_2, %c0_3] : memref<2x128xf32, #tpu.memory_space<vmem>>, vector<2x128xf32>
    %3 = arith.addf %1, %2 : vector<2x128xf32>
    %c0_4 = arith.constant 0 : index
    %c0_5 = arith.constant 0 : index
    %c0_6 = arith.constant 0 : index
    %4 = vector.load %arg4[%c0_4, %c0_5, %c0_6] : memref<1x2x128xf32, #tpu.memory_space<vmem>>, vector<1x2x128xf32>
    %5 = vector.shape_cast %4 : vector<1x2x128xf32> to vector<2x128xf32>
    %6 = vector.shape_cast %3 : vector<2x128xf32> to vector<1x2x128xf32>
    tpu.vector_store %arg4[%c0_4, %c0_5, %c0_6], %6 {strides = array<i32>} : memref<1x2x128xf32, #tpu.memory_space<vmem>>, vector<1x2x128xf32>,
    return
  }
  func.func @transform_0(%arg0: i32, %arg1: i32) -> (i32, i32, i32) {
    %c0_i32 = arith.constant 0 : i32
    %c0_i32_0 = arith.constant 0 : i32
    return %arg1, %arg0, %c0_i32 : i32, i32, i32
  }
  func.func @transform_1(%arg0: i32, %arg1: i32) -> (i32, i32) {
    %c0_i32 = arith.constant 0 : i32
    %c0_i32_0 = arith.constant 0 : i32
    return %arg0, %c0_i32 : i32, i32
  }
  func.func @transform_2(%arg0: i32, %arg1: i32) -> (i32, i32, i32) {
    %c0_i32 = arith.constant 0 : i32
    %c0_i32_0 = arith.constant 0 : i32
    return %arg1, %arg0, %c0_i32 : i32, i32, i32
  }
}

</mosaic_0001>

<llo_original>
// kernel: tpu_custom_call.1
$region0: #{tpu_custom_call.1}
  #allocation0 [shape = 'u32[]', space=smem, size = 0x4, offset = 0x4, fixed_abs, tag = 'smem constant byte address 0x4 - core index']
  #allocation1 [shape = 'u32[72,128]{1,0:T(1,128)}', space=vmem, size = 0x9000, scoped, tag = 'internal scratch']
  %s0 = inlined_call_operand.hbm [shape: f32[2,2,128], index: 0, kind: input, shape index: {}]
  %s1 = inlined_call_operand.hbm [shape: f32[2,128], index: 1, kind: input, shape index: {}]
  %s2 = inlined_call_operand.hbm [shape: f32[2,2,128], index: 2, kind: output, shape index: {}]
  %s3 = sld [smem:[#allocation0]]
  $region49: #{tpu_custom_call.1} parent=0
    _
  %s5 = ssub.s32 1, %s3
  %s6 = scalar_select 0, %s5, %s3
  $region1: #{tpu_custom_call.1} parent=0
    #allocation2 [shape = 'u8[2048]{0}', space=vmem, size = 0x800, scoped, tag = 'input window, operand 0']
    #allocation3 [shape = 's32[2]{0}', space=sflag, size = 0x8, scoped, tag = 'scoped memory for tpu_custom_call.1']
    #allocation4 [shape = 's32[2]{0}', space=sflag, size = 0x8, scoped, tag = 'scoped memory for tpu_custom_call.1']
    #allocation5 [shape = 'u8[1024]{0}', space=vmem, size = 0x400, scoped, tag = 'input window, operand 1, single buffered']
    #allocation6 [shape = 's32[1]{0}', space=sflag, size = 0x4, scoped, tag = 'scoped memory for tpu_custom_call.1']
    #allocation7 [shape = 'u8[2048]{0}', space=vmem, size = 0x800, scoped, tag = 'output window, operand 0']
    %7 = vsyncpa [#allocation3], 0
    %s8 = scalar_lea.sflag [#allocation3], 1
    %9 = vsyncpa %s8, 0
    %10 = vsyncpa [#allocation6], 0
    %11 = vsyncpa [#allocation4], 0
    %s12 = scalar_lea.sflag [#allocation4], 1
    %13 = vsyncpa %s12, 0
    loop: start=0, step=1, limit=4
    $region2: #{tpu_custom_call.1} parent=1 // loop_pre_header
      _
    $region3: #{tpu_custom_call.1} parent=1 // loop_header
      %s15 = sphi 0, %s19
      %p16 = scmp.ge.s32.totalorder %s15, 4
      %s22 = sphi 0, %s34
      %s23 = sphi 0, %s30
      %s24 = sphi 0, %s22
      %s25 = sphi 0, %s23
      %s26 = sphi 0, %s24
      %s27 = sphi 0, %s25
      %s39 = sphi 0, %s41
      %s42 = sphi 0, %s39
      %s43 = sphi 0, %s42
      %s59 = sphi 0, %s43
      %s65 = sphi 0, %s67
      %s68 = sphi 0, %s65
      %s69 = sphi 0, %s68
      %s85 = sphi 0, %s69
      %s93 = sphi 0, %s95
      %s96 = sphi 0, %s93
      %s97 = sphi 0, %s96
      %s113 = sphi 0, %s97
    $region4: #{tpu_custom_call.1} parent=1 // loop_header_branch
      %18 = sbr.rel (%p16) target = $region8
    $region5: #{tpu_custom_call.1} parent=1 // loop_body
      %s20 = ssub.s32 %s15, 1
      %s21 = ssub.s32 %s15, 2
      %s28 = sadd.s32 1, %s23
      %p29 = scmp.ge.s32.totalorder %s28, 2
      %s30 = scalar_select %p29, 0, %s28
      %s31 = sadd.s32 1, %s22
      %s32 = scalar_select %p29, %s31, %s22
      %p33 = scmp.ge.s32.totalorder %s32, 1
      %s34 = scalar_select %p33, 0, %s32
      %s35 = ssub.s32 %s23, %s30
      %s36 = ssub.s32 %s22, %s34
      %s37 = sor.u32 %s35, %s36
      %p38 = scmp.eq.s32.totalorder %s37, 0
      %s40 = sadd.s32 %s39, 1
      %s41 = scalar_select %p38, %s39, %s40
      %p44 = pneg %p38
      %p45 = scmp.eq.s32.totalorder %s15, 1
      %p46 = por %p44, %p45
      %p47 = scmp.ne.s32.totalorder %s39, %s42
      %p48 = scmp.eq.s32.totalorder %s15, 0
      %p49 = por %p47, %p48
      %p50 = scmp.ne.s32.totalorder %s39, %s42
      %p51 = scmp.eq.s32.totalorder %s20, 1
      %p52 = por %p50, %p51
      %p53 = scmp.ne.s32.totalorder %s42, %s43
      %p54 = scmp.eq.s32.totalorder %s20, 0
      %p55 = por %p53, %p54
      %p56 = scmp.ne.s32.totalorder %s42, %s43
      %p57 = scmp.eq.s32.totalorder %s21, 1
      %p58 = por %p56, %p57
      %p60 = scmp.ne.s32.totalorder %s43, %s59
      %p61 = scmp.eq.s32.totalorder %s21, 0
      %p62 = por %p60, %p61
      %s63 = ssub.s32 %s22, %s34
      %p64 = scmp.eq.s32.totalorder %s63, 0
      %s66 = sadd.s32 %s65, 1
      %s67 = scalar_select %p64, %s65, %s66
      %p70 = pneg %p64
      %p71 = scmp.eq.s32.totalorder %s15, 1
      %p72 = por %p70, %p71
      %p73 = scmp.ne.s32.totalorder %s65, %s68
      %p74 = scmp.eq.s32.totalorder %s15, 0
      %p75 = por %p73, %p74
      %p76 = scmp.ne.s32.totalorder %s65, %s68
      %p77 = scmp.eq.s32.totalorder %s20, 1
      %p78 = por %p76, %p77
      %p79 = scmp.ne.s32.totalorder %s68, %s69
      %p80 = scmp.eq.s32.totalorder %s20, 0
      %p81 = por %p79, %p80
      %p82 = scmp.ne.s32.totalorder %s68, %s69
      %p83 = scmp.eq.s32.totalorder %s21, 1
      %p84 = por %p82, %p83
      %p86 = scmp.ne.s32.totalorder %s69, %s85
      %p87 = scmp.eq.s32.totalorder %s21, 0
      %p88 = por %p86, %p87
      %s89 = ssub.s32 %s23, %s30
      %s90 = ssub.s32 %s22, %s34
      %s91 = sor.u32 %s89, %s90
      %p92 = scmp.eq.s32.totalorder %s91, 0
      %s94 = sadd.s32 %s93, 1
      %s95 = scalar_select %p92, %s93, %s94
      %p98 = pneg %p92
      %p99 = scmp.eq.s32.totalorder %s15, 1
      %p100 = por %p98, %p99
      %p101 = scmp.ne.s32.totalorder %s93, %s96
      %p102 = scmp.eq.s32.totalorder %s15, 0
      %p103 = por %p101, %p102
      %p104 = scmp.ne.s32.totalorder %s93, %s96
      %p105 = scmp.eq.s32.totalorder %s20, 1
      %p106 = por %p104, %p105
      %p107 = scmp.ne.s32.totalorder %s96, %s97
      %p108 = scmp.eq.s32.totalorder %s20, 0
      %p109 = por %p107, %p108
      %p110 = scmp.ne.s32.totalorder %s96, %s97
      %p111 = scmp.eq.s32.totalorder %s21, 1
      %p112 = por %p110, %p111
      %p114 = scmp.ne.s32.totalorder %s97, %s113
      %p115 = scmp.eq.s32.totalorder %s21, 0
      %p116 = por %p114, %p115
      %p117 = scmp.le.s32.totalorder 1, %s15
      %p118 = scmp.lt.s32.totalorder %s15, 3
      %p119 = pnand %p117, %p118
      %p120 = pneg %p119
      // Predicated region
      $region9: #{tpu_custom_call.1} parent=5 // pred_check
        _
      $region10: #{tpu_custom_call.1} parent=5 // pred_check_branch
        %122 = sbr.rel (%p119) target = $region12
      $region11: #{tpu_custom_call.1} parent=5 // pred_region
        %s123 = ssub.s32 %s15, 1
        // Predicated region
        $region13: #{tpu_custom_call.1} parent=11 // pred_check
          %p124 = pneg %p81
        $region14: #{tpu_custom_call.1} parent=11 // pred_check_branch
          %126 = sbr.rel (%p124) target = $region16
        $region15: #{tpu_custom_call.1} parent=11 // pred_region
          %128 = vsyncadd [#allocation6], 0
          %s129 = smul.addr %s24, 2
          %s130 = scalar_lea.hbm %s1, %s129
          %s132 = sshll.u32 %s130, 4
          %s133 = int_to_ptr.hbm [resolvable:$true] %s132
          %s134 = sshll.u32 [#allocation5], 4
          %s135 = int_to_ptr.vmem [resolvable:$true] %s134
          %137 = dma.hbm_to_vmem [thread:$0]  %s133, 32, %s135, [#allocation6]
        $region16: #{tpu_custom_call.1} parent=11 // pred_fallthru
          _
      $region12: #{tpu_custom_call.1} parent=5 // pred_fallthru
        _
      %p138 = scmp.lt.s32.totalorder %s15, 2
      // Predicated region
      $region17: #{tpu_custom_call.1} parent=5 // pred_check
        %p139 = pneg %p138
      $region18: #{tpu_custom_call.1} parent=5 // pred_check_branch
        %141 = sbr.rel (%p139) target = $region20
      $region19: #{tpu_custom_call.1} parent=5 // pred_region
        // Predicated region
        $region21: #{tpu_custom_call.1} parent=19 // pred_check
          %p142 = pneg %p49
        $region22: #{tpu_custom_call.1} parent=19 // pred_check_branch
          %144 = sbr.rel (%p142) target = $region24
        $region23: #{tpu_custom_call.1} parent=19 // pred_region
          %s145 = sand.u32 %s39, 1
          %s146 = scalar_lea.sflag [#allocation3], %s145
          %s147 = sand.u32 %s39, 1
          %s148 = smul.addr %s147, 2
          %s149 = scalar_lea.vmem [#allocation2], %s148
          %151 = vsyncadd %s146, 0
          %s152 = sadd.s32 %s22, %s23
          %s153 = smul.addr %s152, 2
          %s154 = scalar_lea.hbm %s0, %s153
          %s156 = sshll.u32 %s154, 4
          %s157 = int_to_ptr.hbm [resolvable:$true] %s156
          %s158 = sshll.u32 %s149, 4
          %s159 = int_to_ptr.vmem [resolvable:$true] %s158
          %161 = dma.hbm_to_vmem [thread:$0]  %s157, 32, %s159, %s146
        $region24: #{tpu_custom_call.1} parent=19 // pred_fallthru
          _
      $region20: #{tpu_custom_call.1} parent=5 // pred_fallthru
        _
      %p162 = scmp.le.s32.totalorder 1, %s15
      %p163 = scmp.lt.s32.totalorder %s15, 3
      %p164 = pnand %p162, %p163
      %p165 = pneg %p164
      // Predicated region
      $region25: #{tpu_custom_call.1} parent=5 // pred_check
        _
      $region26: #{tpu_custom_call.1} parent=5 // pred_check_branch
        %167 = sbr.rel (%p164) target = $region28
      $region27: #{tpu_custom_call.1} parent=5 // pred_region
        %s168 = ssub.s32 %s15, 1
        %s169 = sand.u32 %s42, 1
        %s170 = scalar_lea.sflag [#allocation3], %s169
        %s171 = sand.u32 %s42, 1
        %s172 = smul.addr %s171, 2
        %s173 = scalar_lea.vmem [#allocation2], %s172
        // Predicated region
        $region29: #{tpu_custom_call.1} parent=27 // pred_check
          %p174 = pneg %p55
        $region30: #{tpu_custom_call.1} parent=27 // pred_check_branch
          %176 = sbr.rel (%p174) target = $region32
        $region31: #{tpu_custom_call.1} parent=27 // pred_region
          %178 = dma.done %s170, 32
        $region32: #{tpu_custom_call.1} parent=27 // pred_fallthru
          _
        // Predicated region
        $region33: #{tpu_custom_call.1} parent=27 // pred_check
          %p179 = pneg %p81
        $region34: #{tpu_custom_call.1} parent=27 // pred_check_branch
          %181 = sbr.rel (%p179) target = $region36
        $region35: #{tpu_custom_call.1} parent=27 // pred_region
          %183 = dma.done [#allocation6], 32
        $region36: #{tpu_custom_call.1} parent=27 // pred_fallthru
          _
        %s184 = sand.u32 %s42, 1
        %s185 = scalar_lea.sflag [#allocation3], %s184
        %s186 = sand.u32 %s42, 1
        %s187 = smul.addr %s186, 2
        %s188 = scalar_lea.vmem [#allocation2], %s187
        %p189 = pneg %p55
        %p190 = pneg %p52
        %p191 = pneg %p81
        %p192 = pneg %p78
        %p193 = pneg %p109
        %p194 = pneg %p106
        %s195 = sand.u32 %s96, 1
        %s196 = scalar_lea.sflag [#allocation4], %s195
        %s197 = sand.u32 %s96, 1
        %s198 = smul.addr %s197, 2
        %s199 = scalar_lea.vmem [#allocation7], %s198
        %v200 = vld [vmem:[%s173] sm:$0x3]
        %v201 = vld [vmem:[#allocation5] sm:$0x3]
        %v202 = vadd.f32 %v200, %v201
        %203 = vst [vmem:[%s199] sm:$0x3] %v202
        %s204 = sand.u32 %s96, 1
        %s205 = scalar_lea.sflag [#allocation4], %s204
        %s206 = sand.u32 %s96, 1
        %s207 = smul.addr %s206, 2
        %s208 = scalar_lea.vmem [#allocation7], %s207
        // Predicated region
        $region37: #{tpu_custom_call.1} parent=27 // pred_check
          %p209 = pneg %p106
        $region38: #{tpu_custom_call.1} parent=27 // pred_check_branch
          %211 = sbr.rel (%p209) target = $region40
        $region39: #{tpu_custom_call.1} parent=27 // pred_region
          %213 = vsyncadd %s205, 0
          %s214 = sadd.s32 %s24, %s25
          %s215 = smul.addr %s214, 2
          %s216 = scalar_lea.hbm %s2, %s215
          %s218 = sshll.u32 %s208, 4
          %s219 = int_to_ptr.vmem [resolvable:$true] %s218
          %s220 = sshll.u32 %s216, 4
          %s221 = int_to_ptr.hbm [resolvable:$true] %s220
          %223 = dma.vmem_to_hbm [thread:$0]  %s219, 32, %s221, %s205
        $region40: #{tpu_custom_call.1} parent=27 // pred_fallthru
          _
      $region28: #{tpu_custom_call.1} parent=5 // pred_fallthru
        _
      %p224 = scmp.le.s32.totalorder 2, %s15
      // Predicated region
      $region41: #{tpu_custom_call.1} parent=5 // pred_check
        %p225 = pneg %p224
      $region42: #{tpu_custom_call.1} parent=5 // pred_check_branch
        %227 = sbr.rel (%p225) target = $region44
      $region43: #{tpu_custom_call.1} parent=5 // pred_region
        %s228 = ssub.s32 %s15, 2
        // Predicated region
        $region45: #{tpu_custom_call.1} parent=43 // pred_check
          %p229 = pneg %p112
        $region46: #{tpu_custom_call.1} parent=43 // pred_check_branch
          %231 = sbr.rel (%p229) target = $region48
        $region47: #{tpu_custom_call.1} parent=43 // pred_region
          %s232 = sand.u32 %s97, 1
          %s233 = scalar_lea.sflag [#allocation4], %s232
          %s234 = sand.u32 %s97, 1
          %s235 = smul.addr %s234, 2
          %s236 = scalar_lea.vmem [#allocation7], %s235
          %238 = dma.done %s233, 32
        $region48: #{tpu_custom_call.1} parent=43 // pred_fallthru
          _
      $region44: #{tpu_custom_call.1} parent=5 // pred_fallthru
        _
    $region6: #{tpu_custom_call.1} parent=1 // loop_footer
      %s19 = sadd.s32 1, %s15
    $region7: #{tpu_custom_call.1} parent=1 // loop_footer_branch
      %14 = sbr.rel target = $region3
    $region8: #{tpu_custom_call.1} parent=1 // loop_exit
      _
    %239 = vsyncpa [#allocation3], 1
    %s240 = scalar_lea.sflag [#allocation3], 1
    %241 = vsyncpa %s240, 1
    %242 = vsyncpa [#allocation6], 1
    %243 = vsyncpa [#allocation4], 1
    %s244 = scalar_lea.sflag [#allocation4], 1
    %245 = vsyncpa %s244, 1

</llo_original>
